<compile_context>
chip_gen: v7x
topology: tpu7x:2x2x1
jax: 0.10.0
libtpu: 0.0.40
codegen_flags: <defaults>
</compile_context>

<pallas_src>
import functools

import jax
import jax.numpy as jnp
from jax.experimental import pallas as pl
from jax.experimental.pallas import tpu as pltpu


# ----------------------------------------------------------------------------
# Kernels
# ----------------------------------------------------------------------------
def _fused_epilogue_kernel(x_ref, noise_ref, w_ref, style_ref, o_ref):
    # x_ref:     (1, Ct, HW)   activation tile
    # noise_ref: (1, 1,  HW)   per-batch noise plane (resident across C-tiles)
    # w_ref:     (1, Ct, 1)    per-channel noise weights
    # style_ref: (1, Ct, 2)    [..., 0] = scale offset, [..., 1] = bias
    # o_ref:     (1, Ct, HW)
    x = x_ref[0]                                                   # (Ct, HW)
    n = noise_ref[0]                                               # (1, HW)
    w = w_ref[0]                                                   # (Ct, 1)

    # 1. noise injection
    x = x + w * n
    # 2. LeakyReLU(0.2)
    x = jnp.maximum(x, jnp.float32(0.2) * x)

    # 3. InstanceNorm2d stats in one pass (sum / sum-of-squares), no big temp.
    inv_hw = jnp.float32(1.0 / x.shape[-1])
    mean = jnp.sum(x, axis=-1, keepdims=True) * inv_hw             # (Ct, 1)
    ex2 = jnp.sum(x * x, axis=-1, keepdims=True) * inv_hw          # (Ct, 1)
    var = jnp.maximum(ex2 - mean * mean, jnp.float32(0.0))         # biased var
    rstd = jax.lax.rsqrt(var + jnp.float32(1e-5))                  # (Ct, 1)

    # 4. fold normalization + style modulation into one per-element FMA.
    style = style_ref[0]                                           # (Ct, 2)
    a = rstd * (style[:, 0:1] + jnp.float32(1.0))                  # (Ct, 1)
    c = style[:, 1:2] - mean * a                                   # (Ct, 1)
    o_ref[0] = x * a + c


def _stats_kernel(x_ref, noise_ref, w_ref, sum_ref, sq_ref):
    # Pass A of the large-HW path: accumulate sum / sum-of-squares of
    # leaky_relu(x + w*noise) over spatial tiles (reduction axis = grid axis 2).
    # x_ref: (1, Ct, HWt)  noise_ref: (1, 1, HWt)  w_ref: (1, Ct, 1)
    # sum_ref / sq_ref: (1, Ct, 1) resident accumulators.
    @pl.when(pl.program_id(2) == 0)
    def _():
        sum_ref[...] = jnp.zeros_like(sum_ref)
        sq_ref[...] = jnp.zeros_like(sq_ref)

    x = x_ref[0] + w_ref[0] * noise_ref[0]
    x = jnp.maximum(x, jnp.float32(0.2) * x)
    sum_ref[0] += jnp.sum(x, axis=-1, keepdims=True)
    sq_ref[0] += jnp.sum(x * x, axis=-1, keepdims=True)


def _apply_kernel(x_ref, noise_ref, w_ref, style_ref, sum_ref, sq_ref, o_ref,
                  *, inv_hw):
    # Pass B of the large-HW path: recompute noise+lrelu on the tile and apply
    # the folded normalize+style FMA using the precomputed stats.
    x = x_ref[0] + w_ref[0] * noise_ref[0]
    x = jnp.maximum(x, jnp.float32(0.2) * x)

    mean = sum_ref[0] * jnp.float32(inv_hw)                        # (Ct, 1)
    ex2 = sq_ref[0] * jnp.float32(inv_hw)                          # (Ct, 1)
    var = jnp.maximum(ex2 - mean * mean, jnp.float32(0.0))
    rstd = jax.lax.rsqrt(var + jnp.float32(1e-5))

    style = style_ref[0]                                           # (Ct, 2)
    a = rstd * (style[:, 0:1] + jnp.float32(1.0))
    c = style[:, 1:2] - mean * a
    o_ref[0] = x * a + c


# ----------------------------------------------------------------------------
# Tiling helpers
# ----------------------------------------------------------------------------
def _pick_tile(total, quantum, max_elems):
    """Largest t dividing `total`, with t % quantum == 0 (or t == total),
    and t <= max_elems.  Falls back to `total` if no such divisor exists."""
    if total <= max_elems:
        return total
    t = (max_elems // quantum) * quantum
    t = max(int(t), quantum)
    while t > quantum and total % t != 0:
        t -= quantum
    if total % t != 0:
        return total
    return t


def _vmem_limit(*live_tile_bytes):
    needed = 2 * sum(live_tile_bytes) + (2 << 20)   # double-buffered + slack
    return int(min(max(needed, 32 << 20), 100 << 20))


# ----------------------------------------------------------------------------
# Wrapper
# ----------------------------------------------------------------------------
def layer_epilogue(x_nchw, noise_b1hw, noise_weight_c, styles_b2c,
                   *, tile_budget_bytes=4 << 20):
    """StyleGAN LayerEpilogue forward.

    Args:
      x_nchw:         (B, C, H, W) float32
      noise_b1hw:     (B, 1, H, W) float32
      noise_weight_c: (C,)         float32  (NoiseLayer.weight)
      styles_b2c:     (B, 2, C)    float32  (styles_in_slice squeezed of the
                                             trailing (1,1) spatial dims)
    Returns (B, C, H, W) float32.
    """
    B, C, H, W = x_nchw.shape
    HW = H * W
    elt = 4  # float32

    x = x_nchw.reshape(B, C, HW)
    noise = noise_b1hw.reshape(B, 1, HW)
    w = noise_weight_c.reshape(1, C, 1)
    styles = jnp.transpose(styles_b2c, (0, 2, 1))                  # (B, C, 2)

    min_ct = C if C < 8 else 8

    if min_ct * HW * elt <= tile_budget_bytes:
        # ------------------------- fast fused path -------------------------
        ct = _pick_tile(C, 8, tile_budget_bytes // (HW * elt))
        num_ct = C // ct
        tile_bytes = ct * HW * elt
        noise_bytes = HW * elt

        cost = pl.CostEstimate(
            flops=9 * B * C * HW,
            transcendentals=B * C,
            bytes_accessed=2 * B * C * HW * elt + B * HW * elt
            + B * C * 2 * elt + C * elt,
        )

        out = pl.pallas_call(
            _fused_epilogue_kernel,
            out_shape=jax.ShapeDtypeStruct((B, C, HW), jnp.float32),
            grid_spec=pltpu.PrefetchScalarGridSpec(
                num_scalar_prefetch=0,
                grid=(B, num_ct),
                in_specs=[
                    pl.BlockSpec((1, ct, HW), lambda b, c: (b, c, 0)),
                    # noise: same block across all C-tiles of a batch
                    pl.BlockSpec((1, 1, HW), lambda b, c: (b, 0, 0)),
                    pl.BlockSpec((1, ct, 1), lambda b, c: (0, c, 0)),
                    pl.BlockSpec((1, ct, 2), lambda b, c: (b, c, 0)),
                ],
                out_specs=pl.BlockSpec((1, ct, HW), lambda b, c: (b, c, 0)),
            ),
            compiler_params=pltpu.CompilerParams(
                dimension_semantics=("parallel", "parallel"),
                vmem_limit_bytes=_vmem_limit(tile_bytes, tile_bytes,
                                             noise_bytes),
            ),
            cost_estimate=cost,
        )(x, noise, w, styles)
        return out.reshape(B, C, H, W)

    # --------------------- large-HW two-pass path ---------------------
    # A full (8, HW) tile does not fit the VMEM budget (e.g. 1024^2 planes on
    # v7x) -> tile the spatial axis and split into a stats pass plus an apply
    # pass (re-doing the cheap noise+lrelu instead of spilling it to HBM).
    ct = _pick_tile(C, 8, max(8, tile_budget_bytes // (128 * elt)))
    hwt = _pick_tile(HW, 128, max(128, tile_budget_bytes // (ct * elt)))
    num_ct = C // ct
    num_hw = HW // hwt
    tile_bytes = ct * hwt * elt
    noise_bytes = hwt * elt

    cost_a = pl.CostEstimate(
        flops=6 * B * C * HW,
        transcendentals=0,
        bytes_accessed=B * C * HW * elt + B * HW * elt + C * elt
        + 2 * B * C * elt,
    )
    stats_sum, stats_sq = pl.pallas_call(
        _stats_kernel,
        out_shape=(jax.ShapeDtypeStruct((B, C, 1), jnp.float32),
                   jax.ShapeDtypeStruct((B, C, 1), jnp.float32)),
        grid_spec=pltpu.PrefetchScalarGridSpec(
            num_scalar_prefetch=0,
            grid=(B, num_ct, num_hw),
            in_specs=[
                pl.BlockSpec((1, ct, hwt), lambda b, c, h: (b, c, h)),
                pl.BlockSpec((1, 1, hwt), lambda b, c, h: (b, 0, h)),
                pl.BlockSpec((1, ct, 1), lambda b, c, h: (0, c, 0)),
            ],
            out_specs=[
                pl.BlockSpec((1, ct, 1), lambda b, c, h: (b, c, 0)),
                pl.BlockSpec((1, ct, 1), lambda b, c, h: (b, c, 0)),
            ],
        ),
        compiler_params=pltpu.CompilerParams(
            dimension_semantics=("parallel", "parallel", "arbitrary"),
            vmem_limit_bytes=_vmem_limit(tile_bytes, noise_bytes),
        ),
        cost_estimate=cost_a,
    )(x, noise, w)

    cost_b = pl.CostEstimate(
        flops=8 * B * C * HW,
        transcendentals=B * C,
        bytes_accessed=2 * B * C * HW * elt + B * HW * elt
        + B * C * 4 * elt + C * elt,
    )
    out = pl.pallas_call(
        functools.partial(_apply_kernel, inv_hw=float(1.0 / HW)),
        out_shape=jax.ShapeDtypeStruct((B, C, HW), jnp.float32),
        grid_spec=pltpu.PrefetchScalarGridSpec(
            num_scalar_prefetch=0,
            grid=(B, num_ct, num_hw),
            in_specs=[
                pl.BlockSpec((1, ct, hwt), lambda b, c, h: (b, c, h)),
                pl.BlockSpec((1, 1, hwt), lambda b, c, h: (b, 0, h)),
                pl.BlockSpec((1, ct, 1), lambda b, c, h: (0, c, 0)),
                pl.BlockSpec((1, ct, 2), lambda b, c, h: (b, c, 0)),
                pl.BlockSpec((1, ct, 1), lambda b, c, h: (b, c, 0)),
                pl.BlockSpec((1, ct, 1), lambda b, c, h: (b, c, 0)),
            ],
            out_specs=pl.BlockSpec((1, ct, hwt), lambda b, c, h: (b, c, h)),
        ),
        compiler_params=pltpu.CompilerParams(
            dimension_semantics=("parallel", "parallel", "parallel"),
            vmem_limit_bytes=_vmem_limit(tile_bytes, tile_bytes, noise_bytes),
        ),
        cost_estimate=cost_b,
    )(x, noise, w, styles, stats_sum, stats_sq)
    return out.reshape(B, C, H, W)


# ----------------------------------------------------------------------------
# Reference + tests
# ----------------------------------------------------------------------------
def _reference(x, noise, w, styles):
    # pure-JAX reference mirroring the PyTorch forward
    x = x + w.reshape(1, -1, 1, 1) * noise
    x = jnp.where(x >= 0, x, 0.2 * x)
    mean = jnp.mean(x, axis=(2, 3), keepdims=True)
    var = jnp.mean((x - mean) ** 2, axis=(2, 3), keepdims=True)
    x = (x - mean) / jnp.sqrt(var + 1e-5)
    scale = styles[:, 0][:, :, None, None] + 1.0
    bias = styles[:, 1][:, :, None, None]
    return x * scale + bias


def _run_case(key, B, C, H, W, tile_budget_bytes):
    kx, kn, kw, ks = jax.random.split(key, 4)
    x = jax.random.normal(kx, (B, C, H, W), dtype=jnp.float32)
    noise = jax.random.normal(kn, (B, 1, H, W), dtype=jnp.float32)
    # NoiseLayer.weight is zero-initialized in PyTorch; use small deterministic
    # nonzero values so the noise path is actually exercised.
    noise_weight = 0.1 * jax.random.normal(kw, (C,), dtype=jnp.float32)
    styles = 0.5 * jax.random.normal(ks, (B, 2, C), dtype=jnp.float32)

    out = layer_epilogue(x, noise, noise_weight, styles,
                         tile_budget_bytes=tile_budget_bytes)
    out = jax.block_until_ready(out)

    ref = _reference(x, noise, noise_weight, styles)
    assert out.shape == (B, C, H, W)
    assert jnp.allclose(out, ref, atol=1e-4, rtol=1e-4), "mismatch vs reference"


if __name__ == "__main__":
    key = jax.random.PRNGKey(0)
    k0, k1, k2 = jax.random.split(key, 3)

    # Small shape (fast path, channel tile == full C).
    _run_case(k0, B=2, C=4, H=16, W=16, tile_budget_bytes=4 << 20)

    # Channel-tiled fast path (artificially small budget -> Ct=16 tiles,
    # noise-plane stays resident across channel tiles).
    _run_case(k1, B=2, C=32, H=32, W=32, tile_budget_bytes=64 << 10)

    # Large-HW two-pass path (artificially small budget -> spatial tiling,
    # stats accumulation pass + apply pass).
    _run_case(k2, B=2, C=16, H=32, W=32, tile_budget_bytes=16 << 10)

    print("KERNEL_OK")
</pallas_src>

<mosaic_0001>
module attributes {stable_mosaic.version = 11 : i64} {
  func.func @_fused_epilogue_kernel(%arg0: i32, %arg1: i32, %arg2: memref<1x4x256xf32, #tpu.memory_space<vmem>>, %arg3: memref<1x1x256xf32, #tpu.memory_space<vmem>>, %arg4: memref<1x4x1xf32, #tpu.memory_space<vmem>>, %arg5: memref<1x4x2xf32, #tpu.memory_space<vmem>>, %arg6: memref<1x4x256xf32, #tpu.memory_space<vmem>>) attributes {dimension_semantics = [#tpu.dimension_semantics<parallel>, #tpu.dimension_semantics<parallel>], iteration_bounds = array<i64: 2, 1>, scalar_prefetch = 0 : i64, scratch_operands = 0 : i64, tpu.core_type = #tpu.core_type<tc>, window_params = [{transform_indices = @transform_0, window_bounds = array<i64: 1, 4, 256>}, {transform_indices = @transform_1, window_bounds = array<i64: 1, 1, 256>}, {transform_indices = @transform_2, window_bounds = array<i64: 1, 4, 1>}, {transform_indices = @transform_3, window_bounds = array<i64: 1, 4, 2>}, {transform_indices = @transform_4, window_bounds = array<i64: 1, 4, 256>}]} {
    %c0 = arith.constant 0 : index
    %c0_0 = arith.constant 0 : index
    %c0_1 = arith.constant 0 : index
    %0 = vector.load %arg2[%c0, %c0_0, %c0_1] : memref<1x4x256xf32, #tpu.memory_space<vmem>>, vector<1x4x256xf32>
    %1 = vector.shape_cast %0 : vector<1x4x256xf32> to vector<4x256xf32>
    %c0_2 = arith.constant 0 : index
    %c0_3 = arith.constant 0 : index
    %c0_4 = arith.constant 0 : index
    %2 = vector.load %arg3[%c0_2, %c0_3, %c0_4] : memref<1x1x256xf32, #tpu.memory_space<vmem>>, vector<1x1x256xf32>
    %3 = vector.shape_cast %2 : vector<1x1x256xf32> to vector<1x256xf32>
    %c0_5 = arith.constant 0 : index
    %c0_6 = arith.constant 0 : index
    %c0_7 = arith.constant 0 : index
    %4 = vector.load %arg4[%c0_5, %c0_6, %c0_7] : memref<1x4x1xf32, #tpu.memory_space<vmem>>, vector<1x4x1xf32>
    %5 = vector.shape_cast %4 : vector<1x4x1xf32> to vector<4x1xf32>
    %6 = vector.broadcast %5 : vector<4x1xf32> to vector<4x256xf32>
    %7 = vector.broadcast %3 : vector<1x256xf32> to vector<4x256xf32>
    %8 = arith.mulf %6, %7 : vector<4x256xf32>
    %9 = arith.addf %1, %8 : vector<4x256xf32>
    %cst = arith.constant 2.000000e-01 : f32
    %10 = vector.broadcast %cst : f32 to vector<4x256xf32>
    %11 = arith.mulf %10, %9 : vector<4x256xf32>
    %12 = arith.maximumf %9, %11 : vector<4x256xf32>
    %cst_8 = arith.constant dense<0.000000e+00> : vector<4xf32>
    %13 = vector.multi_reduction <add>, %12, %cst_8 [1] : vector<4x256xf32> to vector<4xf32>
    %14 = vector.shape_cast %13 : vector<4xf32> to vector<4x1xf32>
    %cst_9 = arith.constant 3.906250e-03 : f32
    %15 = vector.broadcast %cst_9 : f32 to vector<4x1xf32>
    %16 = arith.mulf %14, %15 : vector<4x1xf32>
    %17 = arith.mulf %12, %12 : vector<4x256xf32>
    %cst_10 = arith.constant dense<0.000000e+00> : vector<4xf32>
    %18 = vector.multi_reduction <add>, %17, %cst_10 [1] : vector<4x256xf32> to vector<4xf32>
    %19 = vector.shape_cast %18 : vector<4xf32> to vector<4x1xf32>
    %cst_11 = arith.constant 3.906250e-03 : f32
    %20 = vector.broadcast %cst_11 : f32 to vector<4x1xf32>
    %21 = arith.mulf %19, %20 : vector<4x1xf32>
    %22 = arith.mulf %16, %16 : vector<4x1xf32>
    %23 = arith.subf %21, %22 : vector<4x1xf32>
    %cst_12 = arith.constant 0.000000e+00 : f32
    %24 = vector.broadcast %cst_12 : f32 to vector<4x1xf32>
    %25 = arith.maximumf %23, %24 : vector<4x1xf32>
    %cst_13 = arith.constant 9.99999974E-6 : f32
    %26 = vector.broadcast %cst_13 : f32 to vector<4x1xf32>
    %27 = arith.addf %25, %26 : vector<4x1xf32>
    %28 = math.rsqrt %27 : vector<4x1xf32>
    %c0_14 = arith.constant 0 : index
    %c0_15 = arith.constant 0 : index
    %c0_16 = arith.constant 0 : index
    %29 = vector.load %arg5[%c0_14, %c0_15, %c0_16] : memref<1x4x2xf32, #tpu.memory_space<vmem>>, vector<1x4x2xf32>
    %30 = vector.shape_cast %29 : vector<1x4x2xf32> to vector<4x2xf32>
    %31 = vector.extract_strided_slice %30 {offsets = [0, 0], sizes = [4, 1], strides = [1, 1]} : vector<4x2xf32> to vector<4x1xf32>
    %cst_17 = arith.constant 1.000000e+00 : f32
    %32 = vector.broadcast %cst_17 : f32 to vector<4x1xf32>
    %33 = arith.addf %31, %32 : vector<4x1xf32>
    %34 = arith.mulf %28, %33 : vector<4x1xf32>
    %35 = vector.extract_strided_slice %30 {offsets = [0, 1], sizes = [4, 1], strides = [1, 1]} : vector<4x2xf32> to vector<4x1xf32>
    %36 = arith.mulf %16, %34 : vector<4x1xf32>
    %37 = arith.subf %35, %36 : vector<4x1xf32>
    %38 = vector.broadcast %34 : vector<4x1xf32> to vector<4x256xf32>
    %39 = arith.mulf %12, %38 : vector<4x256xf32>
    %40 = vector.broadcast %37 : vector<4x1xf32> to vector<4x256xf32>
    %41 = arith.addf %39, %40 : vector<4x256xf32>
    %c0_18 = arith.constant 0 : index
    %c0_19 = arith.constant 0 : index
    %c0_20 = arith.constant 0 : index
    %42 = vector.load %arg6[%c0_18, %c0_19, %c0_20] : memref<1x4x256xf32, #tpu.memory_space<vmem>>, vector<1x4x256xf32>
    %43 = vector.shape_cast %42 : vector<1x4x256xf32> to vector<4x256xf32>
    %44 = vector.shape_cast %41 : vector<4x256xf32> to vector<1x4x256xf32>
    tpu.vector_store %arg6[%c0_18, %c0_19, %c0_20], %44 {strides = array<i32>} : memref<1x4x256xf32, #tpu.memory_space<vmem>>, vector<1x4x256xf32>,
    return
  }
  func.func @transform_0(%arg0: i32, %arg1: i32) -> (i32, i32, i32) {
    %c0_i32 = arith.constant 0 : i32
    %c0_i32_0 = arith.constant 0 : i32
    return %arg0, %arg1, %c0_i32 : i32, i32, i32
  }
  func.func @transform_1(%arg0: i32, %arg1: i32) -> (i32, i32, i32) {
    %c0_i32 = arith.constant 0 : i32
    %c0_i32_0 = arith.constant 0 : i32
    %c0_i32_1 = arith.constant 0 : i32
    return %arg0, %c0_i32, %c0_i32_0 : i32, i32, i32
  }
  func.func @transform_2(%arg0: i32, %arg1: i32) -> (i32, i32, i32) {
    %c0_i32 = arith.constant 0 : i32
    %c0_i32_0 = arith.constant 0 : i32
    %c0_i32_1 = arith.constant 0 : i32
    return %c0_i32, %arg1, %c0_i32_0 : i32, i32, i32
  }
  func.func @transform_3(%arg0: i32, %arg1: i32) -> (i32, i32, i32) {
    %c0_i32 = arith.constant 0 : i32
    %c0_i32_0 = arith.constant 0 : i32
    return %arg0, %arg1, %c0_i32 : i32, i32, i32
  }
  func.func @transform_4(%arg0: i32, %arg1: i32) -> (i32, i32, i32) {
    %c0_i32 = arith.constant 0 : i32
    %c0_i32_0 = arith.constant 0 : i32
    return %arg0, %arg1, %c0_i32 : i32, i32, i32
  }
}

</mosaic_0001>

<llo_original>
// kernel: tpu_custom_call.1
$region0: #{tpu_custom_call.1}
  #allocation0 [shape = 'u32[]', space=smem, size = 0x4, offset = 0x4, fixed_abs, tag = 'smem constant byte address 0x4 - core index']
  #allocation1 [shape = 'u32[144,128]{1,0:T(1,128)}', space=vmem, size = 0x12000, scoped, tag = 'internal scratch']
  %s0 = inlined_call_operand.vmem [shape: f32[2,4,256], index: 0, kind: input, shape index: {}]
  %s1 = inlined_call_operand.hbm [shape: f32[2,1,256], index: 1, kind: input, shape index: {}]
  %s2 = inlined_call_operand.vmem [shape: f32[1,4,1], index: 2, kind: input, shape index: {}]
  %s3 = inlined_call_operand.vmem [shape: f32[2,4,2], index: 3, kind: input, shape index: {}]
  %s4 = inlined_call_operand.hbm [shape: f32[2,4,256], index: 4, kind: output, shape index: {}]
  %s5 = sld [smem:[#allocation0]]
  $region53: #{tpu_custom_call.1} parent=0
    _
  %s7 = ssub.s32 1, %s5
  %s8 = scalar_select 0, %s7, %s5
  $region1: #{tpu_custom_call.1} parent=0
    #allocation2 [shape = 'u8[2048]{0}', space=vmem, size = 0x800, scoped, tag = 'input window, operand 1']
    #allocation3 [shape = 's32[2]{0}', space=sflag, size = 0x8, scoped, tag = 'scoped memory for tpu_custom_call.1']
    #allocation4 [shape = 's32[2]{0}', space=sflag, size = 0x8, scoped, tag = 'scoped memory for tpu_custom_call.1']
    #allocation5 [shape = 'u8[8192]{0}', space=vmem, size = 0x2000, scoped, tag = 'output window, operand 0']
    %9 = vsyncpa [#allocation3], 0
    %s10 = scalar_lea.sflag [#allocation3], 1
    %11 = vsyncpa %s10, 0
    %12 = vsyncpa [#allocation4], 0
    %s13 = scalar_lea.sflag [#allocation4], 1
    %14 = vsyncpa %s13, 0
    loop: start=0, step=1, limit=4
    $region2: #{tpu_custom_call.1} parent=1 // loop_pre_header
      _
    $region3: #{tpu_custom_call.1} parent=1 // loop_header
      %s16 = sphi 0, %s20
      %p17 = scmp.ge.s32.totalorder %s16, 4
      %s23 = sphi 0, %s35
      %s24 = sphi 0, %s31
      %s25 = sphi 0, %s23
      %s26 = sphi 0, %s24
      %s27 = sphi 0, %s25
      %s28 = sphi 0, %s26
      %s40 = sphi 0, %s42
      %s43 = sphi 0, %s40
      %s44 = sphi 0, %s43
      %s60 = sphi 0, %s44
      %s66 = sphi 0, %s68
      %s69 = sphi 0, %s66
      %s70 = sphi 0, %s69
      %s86 = sphi 0, %s70
      %s92 = sphi 0, %s94
      %s95 = sphi 0, %s92
      %s96 = sphi 0, %s95
      %s112 = sphi 0, %s96
      %s120 = sphi 0, %s122
      %s123 = sphi 0, %s120
      %s124 = sphi 0, %s123
      %s140 = sphi 0, %s124
      %s148 = sphi 0, %s150
      %s151 = sphi 0, %s148
      %s152 = sphi 0, %s151
      %s168 = sphi 0, %s152
    $region4: #{tpu_custom_call.1} parent=1 // loop_header_branch
      %19 = sbr.rel (%p17) target = $region8
    $region5: #{tpu_custom_call.1} parent=1 // loop_body
      %s21 = ssub.s32 %s16, 1
      %s22 = ssub.s32 %s16, 2
      %s29 = sadd.s32 1, %s24
      %p30 = scmp.ge.s32.totalorder %s29, 1
      %s31 = scalar_select %p30, 0, %s29
      %s32 = sadd.s32 1, %s23
      %s33 = scalar_select %p30, %s32, %s23
      %p34 = scmp.ge.s32.totalorder %s33, 2
      %s35 = scalar_select %p34, 0, %s33
      %s36 = ssub.s32 %s23, %s35
      %s37 = ssub.s32 %s24, %s31
      %s38 = sor.u32 %s36, %s37
      %p39 = scmp.eq.s32.totalorder %s38, 0
      %s41 = sadd.s32 %s40, 1
      %s42 = scalar_select %p39, %s40, %s41
      %p45 = pneg %p39
      %p46 = scmp.eq.s32.totalorder %s16, 1
      %p47 = por %p45, %p46
      %p48 = scmp.ne.s32.totalorder %s40, %s43
      %p49 = scmp.eq.s32.totalorder %s16, 0
      %p50 = por %p48, %p49
      %p51 = scmp.ne.s32.totalorder %s40, %s43
      %p52 = scmp.eq.s32.totalorder %s21, 1
      %p53 = por %p51, %p52
      %p54 = scmp.ne.s32.totalorder %s43, %s44
      %p55 = scmp.eq.s32.totalorder %s21, 0
      %p56 = por %p54, %p55
      %p57 = scmp.ne.s32.totalorder %s43, %s44
      %p58 = scmp.eq.s32.totalorder %s22, 1
      %p59 = por %p57, %p58
      %p61 = scmp.ne.s32.totalorder %s44, %s60
      %p62 = scmp.eq.s32.totalorder %s22, 0
      %p63 = por %p61, %p62
      %s64 = ssub.s32 %s23, %s35
      %p65 = scmp.eq.s32.totalorder %s64, 0
      %s67 = sadd.s32 %s66, 1
      %s68 = scalar_select %p65, %s66, %s67
      %p71 = pneg %p65
      %p72 = scmp.eq.s32.totalorder %s16, 1
      %p73 = por %p71, %p72
      %p74 = scmp.ne.s32.totalorder %s66, %s69
      %p75 = scmp.eq.s32.totalorder %s16, 0
      %p76 = por %p74, %p75
      %p77 = scmp.ne.s32.totalorder %s66, %s69
      %p78 = scmp.eq.s32.totalorder %s21, 1
      %p79 = por %p77, %p78
      %p80 = scmp.ne.s32.totalorder %s69, %s70
      %p81 = scmp.eq.s32.totalorder %s21, 0
      %p82 = por %p80, %p81
      %p83 = scmp.ne.s32.totalorder %s69, %s70
      %p84 = scmp.eq.s32.totalorder %s22, 1
      %p85 = por %p83, %p84
      %p87 = scmp.ne.s32.totalorder %s70, %s86
      %p88 = scmp.eq.s32.totalorder %s22, 0
      %p89 = por %p87, %p88
      %s90 = ssub.s32 %s24, %s31
      %p91 = scmp.eq.s32.totalorder %s90, 0
      %s93 = sadd.s32 %s92, 1
      %s94 = scalar_select %p91, %s92, %s93
      %p97 = pneg %p91
      %p98 = scmp.eq.s32.totalorder %s16, 1
      %p99 = por %p97, %p98
      %p100 = scmp.ne.s32.totalorder %s92, %s95
      %p101 = scmp.eq.s32.totalorder %s16, 0
      %p102 = por %p100, %p101
      %p103 = scmp.ne.s32.totalorder %s92, %s95
      %p104 = scmp.eq.s32.totalorder %s21, 1
      %p105 = por %p103, %p104
      %p106 = scmp.ne.s32.totalorder %s95, %s96
      %p107 = scmp.eq.s32.totalorder %s21, 0
      %p108 = por %p106, %p107
      %p109 = scmp.ne.s32.totalorder %s95, %s96
      %p110 = scmp.eq.s32.totalorder %s22, 1
      %p111 = por %p109, %p110
      %p113 = scmp.ne.s32.totalorder %s96, %s112
      %p114 = scmp.eq.s32.totalorder %s22, 0
      %p115 = por %p113, %p114
      %s116 = ssub.s32 %s23, %s35
      %s117 = ssub.s32 %s24, %s31
      %s118 = sor.u32 %s116, %s117
      %p119 = scmp.eq.s32.totalorder %s118, 0
      %s121 = sadd.s32 %s120, 1
      %s122 = scalar_select %p119, %s120, %s121
      %p125 = pneg %p119
      %p126 = scmp.eq.s32.totalorder %s16, 1
      %p127 = por %p125, %p126
      %p128 = scmp.ne.s32.totalorder %s120, %s123
      %p129 = scmp.eq.s32.totalorder %s16, 0
      %p130 = por %p128, %p129
      %p131 = scmp.ne.s32.totalorder %s120, %s123
      %p132 = scmp.eq.s32.totalorder %s21, 1
      %p133 = por %p131, %p132
      %p134 = scmp.ne.s32.totalorder %s123, %s124
      %p135 = scmp.eq.s32.totalorder %s21, 0
      %p136 = por %p134, %p135
      %p137 = scmp.ne.s32.totalorder %s123, %s124
      %p138 = scmp.eq.s32.totalorder %s22, 1
      %p139 = por %p137, %p138
      %p141 = scmp.ne.s32.totalorder %s124, %s140
      %p142 = scmp.eq.s32.totalorder %s22, 0
      %p143 = por %p141, %p142
      %s144 = ssub.s32 %s23, %s35
      %s145 = ssub.s32 %s24, %s31
      %s146 = sor.u32 %s144, %s145
      %p147 = scmp.eq.s32.totalorder %s146, 0
      %s149 = sadd.s32 %s148, 1
      %s150 = scalar_select %p147, %s148, %s149
      %p153 = pneg %p147
      %p154 = scmp.eq.s32.totalorder %s16, 1
      %p155 = por %p153, %p154
      %p156 = scmp.ne.s32.totalorder %s148, %s151
      %p157 = scmp.eq.s32.totalorder %s16, 0
      %p158 = por %p156, %p157
      %p159 = scmp.ne.s32.totalorder %s148, %s151
      %p160 = scmp.eq.s32.totalorder %s21, 1
      %p161 = por %p159, %p160
      %p162 = scmp.ne.s32.totalorder %s151, %s152
      %p163 = scmp.eq.s32.totalorder %s21, 0
      %p164 = por %p162, %p163
      %p165 = scmp.ne.s32.totalorder %s151, %s152
      %p166 = scmp.eq.s32.totalorder %s22, 1
      %p167 = por %p165, %p166
      %p169 = scmp.ne.s32.totalorder %s152, %s168
      %p170 = scmp.eq.s32.totalorder %s22, 0
      %p171 = por %p169, %p170
      %p172 = scmp.le.s32.totalorder 1, %s16
      %p173 = scmp.lt.s32.totalorder %s16, 3
      %p174 = pnand %p172, %p173
      %p175 = pneg %p174
      // Predicated region
      $region9: #{tpu_custom_call.1} parent=5 // pred_check
        _
      $region10: #{tpu_custom_call.1} parent=5 // pred_check_branch
        %177 = sbr.rel (%p174) target = $region12
      $region11: #{tpu_custom_call.1} parent=5 // pred_region
        %s178 = ssub.s32 %s16, 1
        // Predicated region
        $region13: #{tpu_custom_call.1} parent=11 // pred_check
          %p179 = pneg %p108
        $region14: #{tpu_custom_call.1} parent=11 // pred_check_branch
          %181 = sbr.rel (%p179) target = $region16
        $region15: #{tpu_custom_call.1} parent=11 // pred_region
          %p182 = scmp.lt.s32.totalorder %s26, 0
          %s183 = scalar_select %p182, %s26, 0
          %s184 = smul.addr %s183, 4
          %s185 = scalar_lea.vmem %s2, %s184
        $region16: #{tpu_custom_call.1} parent=11 // pred_fallthru
          _
      $region12: #{tpu_custom_call.1} parent=5 // pred_fallthru
        _
      %p186 = scmp.lt.s32.totalorder %s16, 2
      // Predicated region
      $region17: #{tpu_custom_call.1} parent=5 // pred_check
        %p187 = pneg %p186
      $region18: #{tpu_custom_call.1} parent=5 // pred_check_branch
        %189 = sbr.rel (%p187) target = $region20
      $region19: #{tpu_custom_call.1} parent=5 // pred_region
        // Predicated region
        $region21: #{tpu_custom_call.1} parent=19 // pred_check
          %p190 = pneg %p50
        $region22: #{tpu_custom_call.1} parent=19 // pred_check_branch
          %192 = sbr.rel (%p190) target = $region24
        $region23: #{tpu_custom_call.1} parent=19 // pred_region
          %p193 = scmp.lt.s32.totalorder %s23, 1
          %s194 = scalar_select %p193, %s23, 1
          %p195 = scmp.lt.s32.totalorder %s24, 0
          %s196 = scalar_select %p195, %s24, 0
          %s197 = smul.addr %s196, 2
          %s198 = smul.addr %s194, 2
          %s199 = sadd.s32 %s197, %s198
          %s200 = smul.addr %s199, 4
          %s201 = scalar_lea.vmem %s0, %s200
        $region24: #{tpu_custom_call.1} parent=19 // pred_fallthru
          _
        // Predicated region
        $region25: #{tpu_custom_call.1} parent=19 // pred_check
          %p202 = pneg %p76
        $region26: #{tpu_custom_call.1} parent=19 // pred_check_branch
          %204 = sbr.rel (%p202) target = $region28
        $region27: #{tpu_custom_call.1} parent=19 // pred_region
          %s205 = sand.u32 %s66, 1
          %s206 = scalar_lea.sflag [#allocation3], %s205
          %s207 = sand.u32 %s66, 1
          %s208 = smul.addr %s207, 2
          %s209 = scalar_lea.vmem [#allocation2], %s208
          %s211 = ssub.s32 32, 32
          %212 = vsyncadd %s206, %s211
          %s213 = smul.addr %s23, 2
          %s214 = smul.addr %s213, 16
          %s215 = scalar_lea.hbm %s1, %s214
          %s217 = sshll.u32 %s209, 4
          %s218 = int_to_ptr.vmem [resolvable:$true] %s217
          %220 = dma.hbm_to_vmem [thread:$0]  %s215, 32, %s218, %s206
        $region28: #{tpu_custom_call.1} parent=19 // pred_fallthru
          _
        // Predicated region
        $region29: #{tpu_custom_call.1} parent=19 // pred_check
          %p221 = pneg %p130
        $region30: #{tpu_custom_call.1} parent=19 // pred_check_branch
          %223 = sbr.rel (%p221) target = $region32
        $region31: #{tpu_custom_call.1} parent=19 // pred_region
          %p224 = scmp.lt.s32.totalorder %s23, 1
          %s225 = scalar_select %p224, %s23, 1
          %p226 = scmp.lt.s32.totalorder %s24, 0
          %s227 = scalar_select %p226, %s24, 0
          %s228 = sadd.s32 %s227, %s225
          %s229 = smul.addr %s228, 4
          %s230 = scalar_lea.vmem %s3, %s229
        $region32: #{tpu_custom_call.1} parent=19 // pred_fallthru
          _
      $region20: #{tpu_custom_call.1} parent=5 // pred_fallthru
        _
      %p231 = scmp.le.s32.totalorder 1, %s16
      %p232 = scmp.lt.s32.totalorder %s16, 3
      %p233 = pnand %p231, %p232
      %p234 = pneg %p233
      // Predicated region
      $region33: #{tpu_custom_call.1} parent=5 // pred_check
        _
      $region34: #{tpu_custom_call.1} parent=5 // pred_check_branch
        %236 = sbr.rel (%p233) target = $region36
      $region35: #{tpu_custom_call.1} parent=5 // pred_region
        %s237 = ssub.s32 %s16, 1
        %s238 = sand.u32 %s69, 1
        %s239 = scalar_lea.sflag [#allocation3], %s238
        %s240 = sand.u32 %s69, 1
        %s241 = smul.addr %s240, 2
        %s242 = scalar_lea.vmem [#allocation2], %s241
        // Predicated region
        $region37: #{tpu_custom_call.1} parent=35 // pred_check
          %p243 = pneg %p82
        $region38: #{tpu_custom_call.1} parent=35 // pred_check_branch
          %245 = sbr.rel (%p243) target = $region40
        $region39: #{tpu_custom_call.1} parent=35 // pred_region
          %246 = dma.done %s239, 32
        $region40: #{tpu_custom_call.1} parent=35 // pred_fallthru
          _
        %p247 = scmp.lt.s32.totalorder %s25, 1
        %s248 = scalar_select %p247, %s25, 1
        %p249 = scmp.lt.s32.totalorder %s26, 0
        %s250 = scalar_select %p249, %s26, 0
        %s251 = smul.addr %s250, 2
        %s252 = smul.addr %s248, 2
        %s253 = sadd.s32 %s251, %s252
        %s254 = smul.addr %s253, 4
        %s255 = scalar_lea.vmem %s0, %s254
        %p256 = pneg %p56
        %p257 = pneg %p53
        %s258 = sand.u32 %s69, 1
        %s259 = scalar_lea.sflag [#allocation3], %s258
        %s260 = sand.u32 %s69, 1
        %s261 = smul.addr %s260, 2
        %s262 = scalar_lea.vmem [#allocation2], %s261
        %p263 = pneg %p82
        %p264 = pneg %p79
        %p265 = scmp.lt.s32.totalorder %s26, 0
        %s266 = scalar_select %p265, %s26, 0
        %s267 = smul.addr %s266, 4
        %s268 = scalar_lea.vmem %s2, %s267
        %p269 = pneg %p108
        %p270 = pneg %p105
        %p271 = scmp.lt.s32.totalorder %s25, 1
        %s272 = scalar_select %p271, %s25, 1
        %p273 = scmp.lt.s32.totalorder %s26, 0
        %s274 = scalar_select %p273, %s26, 0
        %s275 = sadd.s32 %s274, %s272
        %s276 = smul.addr %s275, 4
        %s277 = scalar_lea.vmem %s3, %s276
        %p278 = pneg %p136
        %p279 = pneg %p133
        %p280 = pneg %p164
        %p281 = pneg %p161
        %s282 = sand.u32 %s151, 1
        %s283 = scalar_lea.sflag [#allocation4], %s282
        %s284 = sand.u32 %s151, 1
        %s285 = smul.addr %s284, 8
        %s286 = scalar_lea.vmem [#allocation5], %s285
        %p287 = scmp.lt.s32.totalorder %s25, 1
        %s288 = scalar_select %p287, %s25, 1
        %p289 = scmp.lt.s32.totalorder %s26, 0
        %s290 = scalar_select %p289, %s26, 0
        %s291 = smul.addr %s290, 2
        %s292 = smul.addr %s288, 2
        %s293 = sadd.s32 %s291, %s292
        %s294 = smul.addr %s293, 4
        %s295 = scalar_lea.vmem %s0, %s294
        %p296 = scmp.lt.s32.totalorder %s26, 0
        %s297 = scalar_select %p296, %s26, 0
        %s298 = smul.addr %s297, 4
        %s299 = scalar_lea.vmem %s2, %s298
        %p300 = scmp.lt.s32.totalorder %s25, 1
        %s301 = scalar_select %p300, %s25, 1
        %p302 = scmp.lt.s32.totalorder %s26, 0
        %s303 = scalar_select %p302, %s26, 0
        %s304 = sadd.s32 %s303, %s301
        %s305 = smul.addr %s304, 4
        %s306 = scalar_lea.vmem %s3, %s305
        %v307 = vld [vmem:[%s295] sm:$0xff]
        %v308 = vld [vmem:[%s242] sm:$0x3]
        %v309 = vld [vmem:[%s299] sm:$0xf]
        %311 = vset.pattern.permute.xlu0 0
        %312 = vperm.xlu0 %311, %v309
        %v313 = vpop.permute.xlu0 %312
        %v316 = vlaneseq
        %v317 = vshrl.u32 %v316, 7
        %v318 = vsub.s32 0, %v317
        %v319 = vrot.slane %v308, %v318
        %v320 = vlaneseq
        %v321 = vshrl.u32 %v320, 7
        %v322 = vsub.s32 1, %v321
        %v323 = vrot.slane %v308, %v322
        %v326 = vmul.f32 %v313, %v319
        %v327 = vmul.f32 %v313, %v323
        %v330 = vcombine.low %v326, %v327
        %v332 = vadd.f32 %v307, %v330
        %v333 = vmul.f32 %v332, 0.2
        %v334 = vmax.f32 %v332, %v333
        %v336 = vcombine.high %v334, %v334
        %vm338 = vcmask 1043456
        %v339 = vsel %vm338, %v334, 0.0
        %v340 = vsel %vm338, %v336, 0.0
        %v341 = vadd.f32 %v339, %v340
        %342 = vadd.xlane.f32.xlu0 %v341
        %v343 = vpop.xlane.xlu0 %342
        %v344 = vmul.f32 %v343, 0.00390625
        %v345 = vmul.f32 %v334, %v334
        %v347 = vcombine.high %v345, %v345
        %v349 = vsel %vm338, %v345, 0.0
        %v350 = vsel %vm338, %v347, 0.0
        %v351 = vadd.f32 %v349, %v350
        %352 = vadd.xlane.f32.xlu0 %v351
        %v353 = vpop.xlane.xlu0 %352
        %v354 = vmul.f32 %v353, 0.00390625
        %v355 = vmul.f32 %v344, %v344
        %v356 = vsub.f32 %v354, %v355
        %v357 = vmax.f32 %v356, 0.0
        %v358 = vadd.f32 %v357, 1e-05
        %v359 = vrsqrt.pop %v358
        %v360 = vld [vmem:[%s306] sm:$0xf]
        %v361 = vadd.f32 %v360, 1.0
        %v362 = vmul.f32 %v359, %v361
        %v363 = vmul.f32 %v344, %v362
        %365 = vrot.lane.b32.xlu0 %v363, 1
        %v366 = vpop.permute.xlu0 %365
        %v368 = vsub.f32 %v360, %v366
        %370 = vset.pattern.permute.xlu0 0
        %371 = vperm.xlu0 %370, %v362
        %v372 = vpop.permute.xlu0 %371
        %v374 = vunpack.c.l.s4 839922192
        %v375 = vunpack.c.0.s8 %v374
        %v376 = vlaneseq
        %v377 = vshrl.u32 %v376, 7
        %v378 = vsub.s32 %v375, %v377
        %v379 = vrot.slane %v372, %v378
        %v381 = vmul.f32 %v334, %v379
        %383 = vset.pattern.permute.xlu0 1
        %384 = vperm.xlu0 %383, %v368
        %v385 = vpop.permute.xlu0 %384
        %v387 = vunpack.c.l.s4 839922192
        %v388 = vunpack.c.0.s8 %v387
        %v389 = vlaneseq
        %v390 = vshrl.u32 %v389, 7
        %v391 = vsub.s32 %v388, %v390
        %v392 = vrot.slane %v385, %v391
        %v394 = vadd.f32 %v381, %v392
        %395 = vst [vmem:[%s286] sm:$0xff] %v394
        %s396 = sand.u32 %s151, 1
        %s397 = scalar_lea.sflag [#allocation4], %s396
        %s398 = sand.u32 %s151, 1
        %s399 = smul.addr %s398, 8
        %s400 = scalar_lea.vmem [#allocation5], %s399
        // Predicated region
        $region41: #{tpu_custom_call.1} parent=35 // pred_check
          %p401 = pneg %p161
        $region42: #{tpu_custom_call.1} parent=35 // pred_check_branch
          %403 = sbr.rel (%p401) target = $region44
        $region43: #{tpu_custom_call.1} parent=35 // pred_region
          %s405 = ssub.s32 128, 128
          %406 = vsyncadd %s397, %s405
          %s407 = smul.addr %s26, 2
          %s408 = smul.addr %s25, 2
          %s409 = sadd.s32 %s407, %s408
          %s410 = smul.addr %s409, 64
          %s411 = scalar_lea.hbm %s4, %s410
          %s413 = sshll.u32 %s400, 4
          %s414 = int_to_ptr.vmem [resolvable:$true] %s413
          %416 = dma.vmem_to_hbm [thread:$0]  %s414, 128, %s411, %s397
        $region44: #{tpu_custom_call.1} parent=35 // pred_fallthru
          _
      $region36: #{tpu_custom_call.1} parent=5 // pred_fallthru
        _
      %p417 = scmp.le.s32.totalorder 2, %s16
      // Predicated region
      $region45: #{tpu_custom_call.1} parent=5 // pred_check
        %p418 = pneg %p417
      $region46: #{tpu_custom_call.1} parent=5 // pred_check_branch
        %420 = sbr.rel (%p418) target = $region48
      $region47: #{tpu_custom_call.1} parent=5 // pred_region
        %s421 = ssub.s32 %s16, 2
        // Predicated region
        $region49: #{tpu_custom_call.1} parent=47 // pred_check
          %p422 = pneg %p167
        $region50: #{tpu_custom_call.1} parent=47 // pred_check_branch
          %424 = sbr.rel (%p422) target = $region52
        $region51: #{tpu_custom_call.1} parent=47 // pred_region
          %s425 = sand.u32 %s152, 1
          %s426 = scalar_lea.sflag [#allocation4], %s425
          %s427 = sand.u32 %s152, 1
          %s428 = smul.addr %s427, 8
          %s429 = scalar_lea.vmem [#allocation5], %s428
          %430 = dma.done %s426, 128
        $region52: #{tpu_custom_call.1} parent=47 // pred_fallthru
          _
      $region48: #{tpu_custom_call.1} parent=5 // pred_fallthru
        _
    $region6: #{tpu_custom_call.1} parent=1 // loop_footer
      %s20 = sadd.s32 1, %s16
    $region7: #{tpu_custom_call.1} parent=1 // loop_footer_branch
      %15 = sbr.rel target = $region3
    $region8: #{tpu_custom_call.1} parent=1 // loop_exit
      _
    %431 = vsyncpa [#allocation3], 1
    %s432 = scalar_lea.sflag [#allocation3], 1
    %433 = vsyncpa %s432, 1
    %434 = vsyncpa [#allocation4], 1
    %s435 = scalar_lea.sflag [#allocation4], 1
    %436 = vsyncpa %s435, 1

</llo_original>
